<compile_context>
chip_gen: v7x
topology: tpu7x:2x2x1
jax: 0.10.0
libtpu: 0.0.40
codegen_flags: <defaults>
</compile_context>

<pallas_src>
import functools

import jax
import jax.numpy as jnp
from jax.experimental import pallas as pl
from jax.experimental.pallas import tpu as pltpu


def classifier_kernel(data_ref, params_ref, out_ref, *, N, E, hidden):
    """Fused single-invocation forward.

    data_ref   : [L, 8] f32 — col0/1 node feats (rows 0:N), col2 edge feat (rows 0:E),
                 col3 src idx, col4 dst idx (stored as f32; exact for indices < 2^24).
    params_ref : [R, 2*hidden] f32 packed parameters (see pack_params for layout).
    out_ref    : [1, 2] f32.
    """
    f32 = jnp.float32
    hd = hidden
    data = data_ref[...]
    P = params_ref[...]

    node0 = data[0:N, 0:1]                               # [N, 1]
    node1 = data[0:N, 1:2]                               # [N, 1]
    edge = data[0:E, 2:3]                                # [E, 1]
    src = data[0:E, 3:4].astype(jnp.int32)               # [E, 1]
    dst = data[0:E, 4:5].astype(jnp.int32)               # [E, 1]

    wf = P[0:hd, :]                                      # [hd, 2*hd] = [We | Wn] (layer 1)
    bf = P[hd:hd + 1, :]                                 # [1, 2*hd]  = [be | bn]
    we0 = P[hd + 1:hd + 2, 0:hd]                         # [1, hd]
    be0 = P[hd + 1:hd + 2, hd:2 * hd]                    # [1, hd]
    wn0a = P[hd + 2:hd + 3, 0:hd]                        # [1, hd]  (Wn0 row 0)
    wn0b = P[hd + 2:hd + 3, hd:2 * hd]                   # [1, hd]  (Wn0 row 1)
    bn0 = P[hd + 3:hd + 4, 0:hd]                         # [1, hd]
    wemb = P[hd + 4:2 * hd + 4, 0:2]                     # [hd, 2]
    bemb = P[2 * hd + 4:2 * hd + 5, 0:2]                 # [1, 2]

    # ---- message-passing operators, built in-kernel (no O(E*N) HBM traffic), reused twice ----
    lane_n = jax.lax.broadcasted_iota(jnp.int32, (E, N), 1)
    S = (src == lane_n).astype(f32)                      # [E, N] gather: S[e, n]=1 iff src[e]==n
    D = (dst == lane_n).astype(f32)                      # [E, N]
    deg = jnp.sum(D, axis=0, keepdims=True)              # [1, N] in-degree
    inv = jnp.where(deg > 0.0, 1.0 / jnp.maximum(deg, 1.0), 0.0)
    A = (D * inv).T                                      # [N, E] mean-aggregation (0 if deg==0)

    # ---- Layer 0: GraphNN(2, 1, 32, relu) — K=1/K=2 projections stay on the VPU ----
    h = jnp.maximum(edge * we0 + be0, 0.0)                            # [E, hd]
    w = jnp.maximum(node0 * wn0a + node1 * wn0b + bn0, 0.0)           # [N, hd]
    # update_all(u_mul_e('w','h','m'), mean('m','w'))
    m = jnp.dot(S, w, preferred_element_type=f32) * h                 # [E, hd]
    w = jnp.dot(A, m, preferred_element_type=f32)                     # [N, hd]

    # ---- Layer 1: GraphNNs(shared weights, relu); both projections fused into one MXU pass ----
    stacked = jnp.concatenate([h, w], axis=0)                         # [E+N, hd]
    proj = jnp.dot(stacked, wf, preferred_element_type=f32) + bf      # [E+N, 2*hd]
    h = jnp.maximum(proj[0:E, 0:hd], 0.0)                             # = relu(h @ We + be)
    w = jnp.maximum(proj[E:E + N, hd:2 * hd], 0.0)                    # = relu(w @ Wn + bn)
    m = jnp.dot(S, w, preferred_element_type=f32) * h                 # [E, hd]
    w = jnp.dot(A, m, preferred_element_type=f32)                     # [N, hd]

    # ---- readout: dgl.max_nodes (single graph) + graph_Embedding(32, 2) ----
    hg = jnp.max(w, axis=0, keepdims=True)                            # [1, hd]
    out_ref[...] = jnp.dot(hg, wemb, preferred_element_type=f32) + bemb


def pack_params(params):
    """Pack all 10 parameter tensors into one [R, 2*hd] f32 slab (done ONCE at init)."""
    hd = params["wn"].shape[0]
    rows = 2 * hd + 5
    R = ((rows + 7) // 8) * 8
    P = jnp.zeros((R, 2 * hd), jnp.float32)
    P = P.at[0:hd, 0:hd].set(params["we"])                # layer-1 fused weight [We | Wn]
    P = P.at[0:hd, hd:2 * hd].set(params["wn"])
    P = P.at[hd, 0:hd].set(params["be"][0])               # layer-1 fused bias [be | bn]
    P = P.at[hd, hd:2 * hd].set(params["bn"][0])
    P = P.at[hd + 1, 0:hd].set(params["we0"][0])
    P = P.at[hd + 1, hd:2 * hd].set(params["be0"][0])
    P = P.at[hd + 2, 0:hd].set(params["wn0"][0])
    P = P.at[hd + 2, hd:2 * hd].set(params["wn0"][1])
    P = P.at[hd + 3, 0:hd].set(params["bn0"][0])
    P = P.at[hd + 4:2 * hd + 4, 0:2].set(params["wemb"])
    P = P.at[2 * hd + 4, 0:2].set(params["bemb"][0])
    return P


@jax.jit
def classifier_forward(node_feat, edge_feat, src_idx, dst_idx, packed_params):
    """node_feat: [N, 2] f32, edge_feat: [E, 1] f32, src_idx/dst_idx: [E] int32."""
    N = node_feat.shape[0]
    E = edge_feat.shape[0]
    hidden = packed_params.shape[1] // 2

    # Pack node / edge / src / dst into one [L, 8] f32 slab (one DMA instead of four).
    L = ((max(N, E) + 7) // 8) * 8

    def as_col(v):
        v = v.reshape(-1).astype(jnp.float32)
        return jnp.pad(v, (0, L - v.shape[0]))[:, None]

    data = jnp.concatenate(
        [as_col(node_feat[:, 0]), as_col(node_feat[:, 1]), as_col(edge_feat[:, 0]),
         as_col(src_idx), as_col(dst_idx), jnp.zeros((L, 3), jnp.float32)], axis=1)

    flops = (4 * 2 * E * N * hidden                    # S / A matmuls, two layers
             + 2 * (E + N) * hidden * 2 * hidden       # fused layer-1 projection
             + 4 * (E + N) * hidden                    # layer-0 VPU projections + relu
             + 2 * hidden * 2)                         # readout embedding
    bytes_accessed = (data.size + packed_params.size + 2) * 4
    cost = pl.CostEstimate(flops=flops, transcendentals=0, bytes_accessed=bytes_accessed)

    vmem = pl.BlockSpec(memory_space=pltpu.MemorySpace.VMEM)
    # TODO(synk): when batching graphs, add a 'parallel' grid axis over graph batches and
    #             tile E ('arbitrary') for v7x's 64 MiB VMEM (S/D are O(E*N)).
    return pl.pallas_call(
        functools.partial(classifier_kernel, N=N, E=E, hidden=hidden),
        out_shape=jax.ShapeDtypeStruct((1, 2), jnp.float32),
        in_specs=[vmem, vmem],
        out_specs=vmem,
        cost_estimate=cost,
    )(data, packed_params)


def classifier_reference(node_feat, edge_feat, src_idx, dst_idx, params):
    """Pure-JAX reference of the PyTorch/DGL forward (for correctness check)."""
    N = node_feat.shape[0]
    S = jax.nn.one_hot(src_idx, N, dtype=jnp.float32)                 # [E, N]
    Dm = jax.nn.one_hot(dst_idx, N, dtype=jnp.float32)                # [E, N]
    in_deg = Dm.sum(axis=0)
    inv_deg = jnp.where(in_deg > 0, 1.0 / jnp.maximum(in_deg, 1.0), 0.0)
    A = Dm.T * inv_deg[:, None]                                       # [N, E]

    h = jax.nn.relu(edge_feat @ params["we0"] + params["be0"])
    w = jax.nn.relu(node_feat @ params["wn0"] + params["bn0"])
    m = (S @ w) * h
    w = A @ m
    h = jax.nn.relu(h @ params["we"] + params["be"])
    w = jax.nn.relu(w @ params["wn"] + params["bn"])
    m = (S @ w) * h
    w = A @ m
    hg = w.max(axis=0, keepdims=True)
    return hg @ params["wemb"] + params["bemb"]


def init_params(key, hidden=32):
    ks = jax.random.split(key, 10)

    def lin(kw, kb, fan_in, fan_out):
        w = jax.random.normal(kw, (fan_in, fan_out), jnp.float32) * (1.0 / jnp.sqrt(fan_in))
        b = jax.random.uniform(kb, (1, fan_out), jnp.float32)
        return w, b

    wn0, bn0 = lin(ks[0], ks[1], 2, hidden)        # GraphConv_node linear: Linear(2, 32)
    we0, be0 = lin(ks[2], ks[3], 1, hidden)        # GraphConv_edge linear: Linear(1, 32)
    wn, bn = lin(ks[4], ks[5], hidden, hidden)     # Circle.nweight / nbias (shared)
    we, be = lin(ks[6], ks[7], hidden, hidden)     # Circle.eweight / ebias (shared)
    wemb, bemb = lin(ks[8], ks[9], hidden, 2)      # graph_Embedding: Linear(32, 2)
    return dict(wn0=wn0, bn0=bn0, we0=we0, be0=be0,
                wn=wn, bn=bn, we=we, be=be, wemb=wemb, bemb=bemb)


if __name__ == "__main__":
    key = jax.random.PRNGKey(0)
    k_node, k_edge, k_src, k_dst, k_param = jax.random.split(key, 5)

    N, E = 16, 32                                                # small synthetic single graph
    node_feat = jax.random.normal(k_node, (N, 2), jnp.float32)   # g.ndata['c']
    edge_feat = jax.random.normal(k_edge, (E, 1), jnp.float32)   # g.edata['d']
    src_idx = jax.random.randint(k_src, (E,), 0, N, jnp.int32)
    dst_idx = jax.random.randint(k_dst, (E,), 0, N, jnp.int32)

    params = init_params(k_param)
    packed = pack_params(params)                                 # packed once, outside jit

    out = classifier_forward(node_feat, edge_feat, src_idx, dst_idx, packed)
    out = jax.block_until_ready(out)
    assert out.shape == (1, 2) and out.dtype == jnp.float32

    ref = classifier_reference(node_feat, edge_feat, src_idx, dst_idx, params)
    assert jnp.allclose(out, ref, rtol=1e-4, atol=1e-4)
    print("KERNEL_OK")
</pallas_src>

<mosaic_0001>
module attributes {stable_mosaic.version = 11 : i64} {
  func.func @classifier_kernel(%arg0: memref<32x8xf32, #tpu.memory_space<vmem>>, %arg1: memref<72x64xf32, #tpu.memory_space<vmem>>, %arg2: memref<1x2xf32, #tpu.memory_space<vmem>>) attributes {dimension_semantics = [], scalar_prefetch = 0 : i64, scratch_operands = 0 : i64, tpu.core_type = #tpu.core_type<tc>} {
    %c0 = arith.constant 0 : index
    %c0_0 = arith.constant 0 : index
    %0 = vector.load %arg0[%c0, %c0_0] : memref<32x8xf32, #tpu.memory_space<vmem>>, vector<32x8xf32>
    %c0_1 = arith.constant 0 : index
    %c0_2 = arith.constant 0 : index
    %1 = vector.load %arg1[%c0_1, %c0_2] : memref<72x64xf32, #tpu.memory_space<vmem>>, vector<72x64xf32>
    %2 = vector.extract_strided_slice %0 {offsets = [0, 0], sizes = [16, 1], strides = [1, 1]} : vector<32x8xf32> to vector<16x1xf32>
    %3 = vector.extract_strided_slice %0 {offsets = [0, 1], sizes = [16, 1], strides = [1, 1]} : vector<32x8xf32> to vector<16x1xf32>
    %4 = vector.extract_strided_slice %0 {offsets = [0, 2], sizes = [32, 1], strides = [1, 1]} : vector<32x8xf32> to vector<32x1xf32>
    %5 = vector.extract_strided_slice %0 {offsets = [0, 3], sizes = [32, 1], strides = [1, 1]} : vector<32x8xf32> to vector<32x1xf32>
    %6 = arith.fptosi %5 : vector<32x1xf32> to vector<32x1xi32>
    %7 = vector.extract_strided_slice %0 {offsets = [0, 4], sizes = [32, 1], strides = [1, 1]} : vector<32x8xf32> to vector<32x1xf32>
    %8 = arith.fptosi %7 : vector<32x1xf32> to vector<32x1xi32>
    %9 = vector.extract_strided_slice %1 {offsets = [0, 0], sizes = [32, 64], strides = [1, 1]} : vector<72x64xf32> to vector<32x64xf32>
    %10 = vector.extract_strided_slice %1 {offsets = [32, 0], sizes = [1, 64], strides = [1, 1]} : vector<72x64xf32> to vector<1x64xf32>
    %11 = vector.extract_strided_slice %1 {offsets = [33, 0], sizes = [1, 32], strides = [1, 1]} : vector<72x64xf32> to vector<1x32xf32>
    %12 = vector.extract_strided_slice %1 {offsets = [33, 32], sizes = [1, 32], strides = [1, 1]} : vector<72x64xf32> to vector<1x32xf32>
    %13 = vector.extract_strided_slice %1 {offsets = [34, 0], sizes = [1, 32], strides = [1, 1]} : vector<72x64xf32> to vector<1x32xf32>
    %14 = vector.extract_strided_slice %1 {offsets = [34, 32], sizes = [1, 32], strides = [1, 1]} : vector<72x64xf32> to vector<1x32xf32>
    %15 = vector.extract_strided_slice %1 {offsets = [35, 0], sizes = [1, 32], strides = [1, 1]} : vector<72x64xf32> to vector<1x32xf32>
    %16 = vector.extract_strided_slice %1 {offsets = [36, 0], sizes = [32, 2], strides = [1, 1]} : vector<72x64xf32> to vector<32x2xf32>
    %17 = vector.extract_strided_slice %1 {offsets = [68, 0], sizes = [1, 2], strides = [1, 1]} : vector<72x64xf32> to vector<1x2xf32>
    %18 = tpu.iota {dimensions = array<i32: 1>} : vector<32x16xi32>
    %19 = vector.broadcast %6 : vector<32x1xi32> to vector<32x16xi32>
    %20 = arith.cmpi eq, %19, %18 : vector<32x16xi32>
    %21 = arith.extui %20 : vector<32x16xi1> to vector<32x16xi32>
    %22 = arith.sitofp %21 : vector<32x16xi32> to vector<32x16xf32>
    %23 = vector.broadcast %8 : vector<32x1xi32> to vector<32x16xi32>
    %24 = arith.cmpi eq, %23, %18 : vector<32x16xi32>
    %25 = arith.extui %24 : vector<32x16xi1> to vector<32x16xi32>
    %26 = arith.sitofp %25 : vector<32x16xi32> to vector<32x16xf32>
    %cst = arith.constant dense<0.000000e+00> : vector<16xf32>
    %27 = vector.multi_reduction <add>, %26, %cst [0] : vector<32x16xf32> to vector<16xf32>
    %28 = vector.shape_cast %27 : vector<16xf32> to vector<1x16xf32>
    %cst_3 = arith.constant 0.000000e+00 : f32
    %29 = vector.broadcast %cst_3 : f32 to vector<1x16xf32>
    %30 = arith.cmpf ogt, %28, %29 : vector<1x16xf32>
    %cst_4 = arith.constant 1.000000e+00 : f32
    %31 = vector.broadcast %cst_4 : f32 to vector<1x16xf32>
    %32 = arith.maximumf %28, %31 : vector<1x16xf32>
    %cst_5 = arith.constant 1.000000e+00 : f32
    %33 = vector.broadcast %cst_5 : f32 to vector<1x16xf32>
    %34 = arith.divf %33, %32 : vector<1x16xf32>
    %cst_6 = arith.constant 0.000000e+00 : f32
    %35 = vector.broadcast %cst_6 : f32 to vector<1x16xf32>
    %36 = arith.select %30, %34, %35 : vector<1x16xi1>, vector<1x16xf32>
    %37 = vector.broadcast %36 : vector<1x16xf32> to vector<32x16xf32>
    %38 = arith.mulf %26, %37 : vector<32x16xf32>
    %39 = tpu.transpose %38, [1, 0] : vector<32x16xf32> -> vector<16x32xf32>
    %40 = vector.broadcast %4 : vector<32x1xf32> to vector<32x32xf32>
    %41 = vector.broadcast %11 : vector<1x32xf32> to vector<32x32xf32>
    %42 = arith.mulf %40, %41 : vector<32x32xf32>
    %43 = vector.broadcast %12 : vector<1x32xf32> to vector<32x32xf32>
    %44 = arith.addf %42, %43 : vector<32x32xf32>
    %cst_7 = arith.constant 0.000000e+00 : f32
    %45 = vector.broadcast %cst_7 : f32 to vector<32x32xf32>
    %46 = arith.maximumf %44, %45 : vector<32x32xf32>
    %47 = vector.broadcast %2 : vector<16x1xf32> to vector<16x32xf32>
    %48 = vector.broadcast %13 : vector<1x32xf32> to vector<16x32xf32>
    %49 = arith.mulf %47, %48 : vector<16x32xf32>
    %50 = vector.broadcast %3 : vector<16x1xf32> to vector<16x32xf32>
    %51 = vector.broadcast %14 : vector<1x32xf32> to vector<16x32xf32>
    %52 = arith.mulf %50, %51 : vector<16x32xf32>
    %53 = arith.addf %49, %52 : vector<16x32xf32>
    %54 = vector.broadcast %15 : vector<1x32xf32> to vector<16x32xf32>
    %55 = arith.addf %53, %54 : vector<16x32xf32>
    %cst_8 = arith.constant 0.000000e+00 : f32
    %56 = vector.broadcast %cst_8 : f32 to vector<16x32xf32>
    %57 = arith.maximumf %55, %56 : vector<16x32xf32>
    %cst_9 = arith.constant dense<0.000000e+00> : vector<32x32xf32>
    %58 = tpu.matmul %22, %57, %cst_9 {dimension_numbers = #tpu.dot_dimension_numbers<[1], [0], [0], [1], [0, 0, 1, 1], [], []>} : vector<32x16xf32>, vector<16x32xf32>, vector<32x32xf32> -> vector<32x32xf32>
    %59 = arith.mulf %58, %46 : vector<32x32xf32>
    %cst_10 = arith.constant dense<0.000000e+00> : vector<16x32xf32>
    %60 = tpu.matmul %39, %59, %cst_10 {dimension_numbers = #tpu.dot_dimension_numbers<[1], [0], [0], [1], [0, 0, 1, 1], [], []>} : vector<16x32xf32>, vector<32x32xf32>, vector<16x32xf32> -> vector<16x32xf32>
    %61 = tpu.concatenate %46, %60 in 0 : vector<32x32xf32>, vector<16x32xf32> -> vector<48x32xf32>
    %cst_11 = arith.constant dense<0.000000e+00> : vector<48x64xf32>
    %62 = tpu.matmul %61, %9, %cst_11 {dimension_numbers = #tpu.dot_dimension_numbers<[1], [0], [0], [1], [0, 0, 1, 1], [], []>} : vector<48x32xf32>, vector<32x64xf32>, vector<48x64xf32> -> vector<48x64xf32>
    %63 = vector.broadcast %10 : vector<1x64xf32> to vector<48x64xf32>
    %64 = arith.addf %62, %63 : vector<48x64xf32>
    %65 = vector.extract_strided_slice %64 {offsets = [0, 0], sizes = [32, 32], strides = [1, 1]} : vector<48x64xf32> to vector<32x32xf32>
    %cst_12 = arith.constant 0.000000e+00 : f32
    %66 = vector.broadcast %cst_12 : f32 to vector<32x32xf32>
    %67 = arith.maximumf %65, %66 : vector<32x32xf32>
    %68 = vector.extract_strided_slice %64 {offsets = [32, 32], sizes = [16, 32], strides = [1, 1]} : vector<48x64xf32> to vector<16x32xf32>
    %cst_13 = arith.constant 0.000000e+00 : f32
    %69 = vector.broadcast %cst_13 : f32 to vector<16x32xf32>
    %70 = arith.maximumf %68, %69 : vector<16x32xf32>
    %cst_14 = arith.constant dense<0.000000e+00> : vector<32x32xf32>
    %71 = tpu.matmul %22, %70, %cst_14 {dimension_numbers = #tpu.dot_dimension_numbers<[1], [0], [0], [1], [0, 0, 1, 1], [], []>} : vector<32x16xf32>, vector<16x32xf32>, vector<32x32xf32> -> vector<32x32xf32>
    %72 = arith.mulf %71, %67 : vector<32x32xf32>
    %cst_15 = arith.constant dense<0.000000e+00> : vector<16x32xf32>
    %73 = tpu.matmul %39, %72, %cst_15 {dimension_numbers = #tpu.dot_dimension_numbers<[1], [0], [0], [1], [0, 0, 1, 1], [], []>} : vector<16x32xf32>, vector<32x32xf32>, vector<16x32xf32> -> vector<16x32xf32>
    %cst_16 = arith.constant dense<0xFF800000> : vector<32xf32>
    %74 = vector.multi_reduction <maximumf>, %73, %cst_16 [0] : vector<16x32xf32> to vector<32xf32>
    %75 = vector.shape_cast %74 : vector<32xf32> to vector<1x32xf32>
    %cst_17 = arith.constant dense<0.000000e+00> : vector<1x2xf32>
    %76 = tpu.matmul %75, %16, %cst_17 {dimension_numbers = #tpu.dot_dimension_numbers<[1], [0], [0], [1], [0, 0, 1, 1], [], []>} : vector<1x32xf32>, vector<32x2xf32>, vector<1x2xf32> -> vector<1x2xf32>
    %77 = arith.addf %76, %17 : vector<1x2xf32>
    %c0_18 = arith.constant 0 : index
    %c0_19 = arith.constant 0 : index
    %78 = vector.load %arg2[%c0_18, %c0_19] : memref<1x2xf32, #tpu.memory_space<vmem>>, vector<1x2xf32>
    tpu.vector_store %arg2[%c0_18, %c0_19], %77 {strides = array<i32>} : memref<1x2xf32, #tpu.memory_space<vmem>>, vector<1x2xf32>,
    return
  }
}

</mosaic_0001>

<llo_original>
// kernel: classifier_forward.1
$region0: #{classifier_forward.1}
  #allocation0 [shape = 'u32[]', space=smem, size = 0x4, offset = 0x4, fixed_abs, tag = 'smem constant byte address 0x4 - core index']
  #allocation1 [shape = 'u32[144,128]{1,0:T(1,128)}', space=vmem, size = 0x12000, scoped, tag = 'internal scratch']
  %s0 = inlined_call_operand.vmem [shape: f32[32,8], index: 0, kind: input, shape index: {}]
  %s1 = inlined_call_operand.vmem [shape: f32[72,64], index: 1, kind: input, shape index: {}]
  %s2 = inlined_call_operand.hbm [shape: f32[1,2], index: 2, kind: output, shape index: {}]
  %s3 = sld [smem:[#allocation0]]
  $region18: #{classifier_forward.1} parent=0
    _
  %s5 = ssub.s32 1, %s3
  %s6 = scalar_select 0, %s5, %s3
  $region1: #{classifier_forward.1} parent=0
    #allocation2 [shape = 'u8[512]{0}', space=vmem, size = 0x400, scoped, tag = 'output window, operand 0, single buffered']
    #allocation3 [shape = 's32[1]{0}', space=sflag, size = 0x4, scoped, tag = 'scoped memory for classifier_forward.1']
    %7 = vsyncpa [#allocation3], 0
    // Predicated region
    $region2: #{classifier_forward.1} parent=1 // pred_check
      _
    $region3: #{classifier_forward.1} parent=1 // pred_check_branch
      %9 = sbr.rel (0) target = $region5
    $region4: #{classifier_forward.1} parent=1 // pred_region
      _
    $region5: #{classifier_forward.1} parent=1 // pred_fallthru
      _
    // Predicated region
    $region6: #{classifier_forward.1} parent=1 // pred_check
      _
    $region7: #{classifier_forward.1} parent=1 // pred_check_branch
      %11 = sbr.rel (0) target = $region9
    $region8: #{classifier_forward.1} parent=1 // pred_region
      _
    $region9: #{classifier_forward.1} parent=1 // pred_fallthru
      _
    %v12 = vld [vmem:[%s0] sm:$0xff]
    %v13 = vld [vmem:[%s0 + $0x8] sm:$0xff]
    %v14 = vld [vmem:[%s0 + $0x10] sm:$0xff]
    %v15 = vld [vmem:[%s0 + $0x18] sm:$0xff]
    %v16 = vld [vmem:[%s1] sm:$0xff]
    %v17 = vld [vmem:[%s1 + $0x8] sm:$0xff]
    %v18 = vld [vmem:[%s1 + $0x10] sm:$0xff]
    %v19 = vld [vmem:[%s1 + $0x18] sm:$0xff]
    %v20 = vld [vmem:[%s1 + $0x20] sm:$0xff]
    %v21 = vld [vmem:[%s1 + $0x28] sm:$0xff]
    %v22 = vld [vmem:[%s1 + $0x30] sm:$0xff]
    %v23 = vld [vmem:[%s1 + $0x38] sm:$0xff]
    %v24 = vld [vmem:[%s1 + $0x40] sm:$0xff]
    %v25 = vcvt.f32.s32.to.zero.pseudo %v12
    %v26 = vcvt.f32.s32.to.zero.pseudo %v13
    %v27 = vcvt.f32.s32.to.zero.pseudo %v14
    %v28 = vcvt.f32.s32.to.zero.pseudo %v15
    %v29 = vlaneseq
    %v30 = vand.u32 %v29, 127
    %31 = vset.pattern.permute.xlu0 3
    %32 = vperm.xlu0 %31, %v25
    %v33 = vpop.permute.xlu0 %32
    %34 = vset.pattern.permute.xlu0 3
    %35 = vperm.xlu0 %34, %v26
    %v36 = vpop.permute.xlu0 %35
    %37 = vset.pattern.permute.xlu0 3
    %38 = vperm.xlu0 %37, %v27
    %v39 = vpop.permute.xlu0 %38
    %40 = vset.pattern.permute.xlu0 3
    %41 = vperm.xlu0 %40, %v28
    %v42 = vpop.permute.xlu0 %41
    %vm43 = vcmp.eq.s32.totalorder %v33, %v30
    %vm44 = vcmp.eq.s32.totalorder %v36, %v30
    %vm45 = vcmp.eq.s32.totalorder %v39, %v30
    %vm46 = vcmp.eq.s32.totalorder %v42, %v30
    %v47 = vsel %vm43, 1, 0
    %v48 = vsel %vm44, 1, 0
    %v49 = vsel %vm45, 1, 0
    %v50 = vsel %vm46, 1, 0
    %v51 = vcvt.s32.f32 %v47
    %v52 = vcvt.s32.f32 %v48
    %v53 = vcvt.s32.f32 %v49
    %v54 = vcvt.s32.f32 %v50
    %55 = vset.pattern.permute.xlu0 4
    %56 = vperm.xlu0 %55, %v25
    %v57 = vpop.permute.xlu0 %56
    %58 = vset.pattern.permute.xlu0 4
    %59 = vperm.xlu0 %58, %v26
    %v60 = vpop.permute.xlu0 %59
    %61 = vset.pattern.permute.xlu0 4
    %62 = vperm.xlu0 %61, %v27
    %v63 = vpop.permute.xlu0 %62
    %64 = vset.pattern.permute.xlu0 4
    %65 = vperm.xlu0 %64, %v28
    %v66 = vpop.permute.xlu0 %65
    %vm67 = vcmp.eq.s32.totalorder %v57, %v30
    %vm68 = vcmp.eq.s32.totalorder %v60, %v30
    %vm69 = vcmp.eq.s32.totalorder %v63, %v30
    %vm70 = vcmp.eq.s32.totalorder %v66, %v30
    %v71 = vsel %vm67, 1, 0
    %v72 = vsel %vm68, 1, 0
    %v73 = vsel %vm69, 1, 0
    %v74 = vsel %vm70, 1, 0
    %v75 = vcvt.s32.f32 %v71
    %v76 = vcvt.s32.f32 %v72
    %v77 = vcvt.s32.f32 %v73
    %v78 = vcvt.s32.f32 %v74
    %vm79 = vcmask 130048
    %v80 = vsel %vm79, %v75, 0.0
    %v81 = vsel %vm79, %v76, 0.0
    %v82 = vadd.f32 %v80, %v81
    %v83 = vsel %vm79, %v77, 0.0
    %v84 = vadd.f32 %v82, %v83
    %v85 = vsel %vm79, %v78, 0.0
    %v86 = vadd.f32 %v84, %v85
    %v87 = vrot.slane %v86, 4
    %v88 = vadd.f32 %v86, %v87
    %v89 = vrot.slane %v88, 2
    %v90 = vadd.f32 %v88, %v89
    %v91 = vrot.slane %v90, 1
    %v92 = vadd.f32 %v90, %v91
    %vm93 = vcmp.gt.f32.partialorder %v92, 0.0
    %v94 = vmax.f32 %v92, 1.0
    %v95 = vrcp.pop %v94
    %v96 = vmul.f32 1.0, %v95
    %v97 = vsel %vm93, %v96, 0.0
    %v98 = vmul.f32 %v75, %v97
    %v99 = vmul.f32 %v76, %v97
    %v100 = vmul.f32 %v77, %v97
    %v101 = vmul.f32 %v78, %v97
    %102 = vxpose.xlu0.b32.start [1/16] %v98, 128
    %103 = vxpose.xlu0.b32.cont [2/16] %v99, 128
    %104 = vxpose.xlu0.b32.cont [3/16] %v100, 128
    %105 = vxpose.xlu0.b32.cont [4/16] %v101, 128
    %106 = vxpose.xlu0.b32.cont [5/16] 0.0, 128
    %107 = vxpose.xlu0.b32.cont [6/16] 0.0, 128
    %108 = vxpose.xlu0.b32.cont [7/16] 0.0, 128
    %109 = vxpose.xlu0.b32.cont [8/16] 0.0, 128
    %110 = vxpose.xlu0.b32.cont [9/16] 0.0, 128
    %111 = vxpose.xlu0.b32.cont [10/16] 0.0, 128
    %112 = vxpose.xlu0.b32.cont [11/16] 0.0, 128
    %113 = vxpose.xlu0.b32.cont [12/16] 0.0, 128
    %114 = vxpose.xlu0.b32.cont [13/16] 0.0, 128
    %115 = vxpose.xlu0.b32.cont [14/16] 0.0, 128
    %116 = vxpose.xlu0.b32.cont [15/16] 0.0, 128
    %117 = vxpose.xlu0.b32.end [16/16] 0.0, 128
    %v118 = vpop.trf.xlu0
    %v119 = vpop.trf.xlu0
    %v120 = vpop.trf.xlu0
    %v121 = vpop.trf.xlu0
    %v122 = vpop.trf.xlu0
    %v123 = vpop.trf.xlu0
    %v124 = vpop.trf.xlu0
    %v125 = vpop.trf.xlu0
    %v126 = vpop.trf.xlu0
    %v127 = vpop.trf.xlu0
    %v128 = vpop.trf.xlu0
    %v129 = vpop.trf.xlu0
    %v130 = vpop.trf.xlu0
    %v131 = vpop.trf.xlu0
    %v132 = vpop.trf.xlu0
    %v133 = vpop.trf.xlu0
    %135 = vset.pattern.permute.xlu0 2
    %136 = vperm.xlu0 %135, %v12
    %v137 = vpop.permute.xlu0 %136
    %140 = vset.pattern.permute.xlu0 2
    %141 = vperm.xlu0 %140, %v13
    %v142 = vpop.permute.xlu0 %141
    %145 = vset.pattern.permute.xlu0 2
    %146 = vperm.xlu0 %145, %v14
    %v147 = vpop.permute.xlu0 %146
    %150 = vset.pattern.permute.xlu0 2
    %151 = vperm.xlu0 %150, %v15
    %v152 = vpop.permute.xlu0 %151
    %v154 = vlaneseq
    %v155 = vshrl.u32 %v154, 7
    %v156 = vsub.s32 1, %v155
    %v157 = vrot.slane %v20, %v156
    %v158 = vmul.f32 %v137, %v157
    %v159 = vmul.f32 %v142, %v157
    %v160 = vmul.f32 %v147, %v157
    %v161 = vmul.f32 %v152, %v157
    %163 = vrot.lane.b32.xlu0 %v157, 96
    %v164 = vpop.permute.xlu0 %163
    %v166 = vadd.f32 %v158, %v164
    %v167 = vadd.f32 %v159, %v164
    %v168 = vadd.f32 %v160, %v164
    %v169 = vadd.f32 %v161, %v164
    %v170 = vmax.f32 %v166, 0.0
    %v171 = vmax.f32 %v167, 0.0
    %v172 = vmax.f32 %v168, 0.0
    %v173 = vmax.f32 %v169, 0.0
    %174 = vset.pattern.permute.xlu0 0
    %175 = vperm.xlu0 %174, %v12
    %v176 = vpop.permute.xlu0 %175
    %178 = vset.pattern.permute.xlu0 0
    %179 = vperm.xlu0 %178, %v13
    %v180 = vpop.permute.xlu0 %179
    %v182 = vlaneseq
    %v183 = vshrl.u32 %v182, 7
    %v184 = vsub.s32 2, %v183
    %v185 = vrot.slane %v20, %v184
    %v186 = vmul.f32 %v176, %v185
    %v187 = vmul.f32 %v180, %v185
    %188 = vset.pattern.permute.xlu0 1
    %189 = vperm.xlu0 %188, %v12
    %v190 = vpop.permute.xlu0 %189
    %192 = vset.pattern.permute.xlu0 1
    %193 = vperm.xlu0 %192, %v13
    %v194 = vpop.permute.xlu0 %193
    %v196 = vmul.f32 %v190, %v185
    %v197 = vmul.f32 %v194, %v185
    %200 = vrot.lane.b32.xlu0 %v196, 96
    %v201 = vpop.permute.xlu0 %200
    %202 = vrot.lane.b32.xlu0 %v197, 96
    %v203 = vpop.permute.xlu0 %202
    %v206 = vadd.f32 %v186, %v201
    %v207 = vadd.f32 %v187, %v203
    %v208 = vlaneseq
    %v209 = vshrl.u32 %v208, 7
    %v210 = vsub.s32 3, %v209
    %v211 = vrot.slane %v20, %v210
    %v212 = vadd.f32 %v206, %v211
    %v213 = vadd.f32 %v207, %v211
    %v214 = vmax.f32 %v212, 0.0
    %v215 = vmax.f32 %v213, 0.0
    %v217 = vsel %vm79, %v51, 0
    %v220 = vsel %vm79, %v52, 0
    %v223 = vsel %vm79, %v53, 0
    %v226 = vsel %vm79, %v54, 0
    %228 = vmatprep.subr.mxu0 0.0
    %229 = vmatpush1.msra.mxu0 %v214
    %230 = vmatprep.subr.mxu0 0.0
    %231 = vmatpush1.msra.mxu0 %v215
    %232 = vmatprep.subr.mxu0 0.0
    %233 = vmatpush1.msra.mxu0 0.0
    %234 = vmatprep.subr.mxu0 0.0
    %235 = vmatpush1.msra.mxu0 0.0
    %236 = vmatprep.subr.mxu0 0.0
    %237 = vmatpush1.msra.mxu0 0.0
    %238 = vmatprep.subr.mxu0 0.0
    %239 = vmatpush1.msra.mxu0 0.0
    %240 = vmatprep.subr.mxu0 0.0
    %241 = vmatpush1.msra.mxu0 0.0
    %242 = vmatprep.subr.mxu0 0.0
    %243 = vmatpush1.msra.mxu0 0.0
    %244 = vmatprep.subr.mxu0 0.0
    %245 = vmatpush1.msra.mxu0 0.0
    %246 = vmatprep.subr.mxu0 0.0
    %247 = vmatpush1.msra.mxu0 0.0
    %248 = vmatprep.subr.mxu0 0.0
    %249 = vmatpush1.msra.mxu0 0.0
    %250 = vmatprep.subr.mxu0 0.0
    %251 = vmatpush1.msra.mxu0 0.0
    %252 = vmatprep.subr.mxu0 0.0
    %253 = vmatpush1.msra.mxu0 0.0
    %254 = vmatprep.subr.mxu0 0.0
    %255 = vmatpush1.msra.mxu0 0.0
    %256 = vmatprep.subr.mxu0 0.0
    %257 = vmatpush1.msra.mxu0 0.0
    %258 = vmatprep.subr.mxu0 0.0
    %259 = vmatpush1.msra.mxu0 0.0
    %260 = vmatprep.subr.mxu0 0.0
    %261 = vmatpush1.msra.mxu0 0.0
    %262 = vmatprep.subr.mxu0 0.0
    %263 = vmatpush1.msra.mxu0 0.0
    %264 = vmatprep.subr.mxu0 0.0
    %265 = vmatpush1.msra.mxu0 0.0
    %266 = vmatprep.subr.mxu0 0.0
    %267 = vmatpush1.msra.mxu0 0.0
    %268 = vmatprep.subr.mxu0 0.0
    %269 = vmatpush1.msra.mxu0 0.0
    %270 = vmatprep.subr.mxu0 0.0
    %271 = vmatpush1.msra.mxu0 0.0
    %272 = vmatprep.subr.mxu0 0.0
    %273 = vmatpush1.msra.mxu0 0.0
    %274 = vmatprep.subr.mxu0 0.0
    %275 = vmatpush1.msra.mxu0 0.0
    %276 = vmatprep.subr.mxu0 0.0
    %277 = vmatpush1.msra.mxu0 0.0
    %278 = vmatprep.subr.mxu0 0.0
    %279 = vmatpush1.msra.mxu0 0.0
    %280 = vmatprep.subr.mxu0 0.0
    %281 = vmatpush1.msra.mxu0 0.0
    %282 = vmatprep.subr.mxu0 0.0
    %283 = vmatpush1.msra.mxu0 0.0
    %284 = vmatprep.subr.mxu0 0.0
    %285 = vmatpush1.msra.mxu0 0.0
    %286 = vmatprep.subr.mxu0 0.0
    %287 = vmatpush1.msra.mxu0 0.0
    %288 = vmatprep.subr.mxu0 0.0
    %289 = vmatpush1.msra.mxu0 0.0
    %290 = vmatprep.subr.mxu0 0.0
    %291 = vmatpush1.msra.mxu0 0.0
    %292 = vmatprep.mubr.f32.mxu0 0.0
    %293 = vmatmul.mubr.f32.gmra.mrb[0].mxu0 %v217
    %v294 = vpop.f32.mrb[0].mxu0
    %v295 = vadd.f32 0.0, %v294
    %v296 = vpop.f32.mrb[0].mxu0
    %297 = vmatprep.mubr.f32.mxu0 0.0
    %298 = vmatmul.mubr.f32.gmra.mrb[0].mxu0 %v220
    %v299 = vpop.f32.mrb[0].mxu0
    %v300 = vadd.f32 0.0, %v299
    %v301 = vpop.f32.mrb[0].mxu0
    %302 = vmatprep.mubr.f32.mxu0 0.0
    %303 = vmatmul.mubr.f32.gmra.mrb[0].mxu0 %v223
    %v304 = vpop.f32.mrb[0].mxu0
    %v305 = vadd.f32 0.0, %v304
    %v306 = vpop.f32.mrb[0].mxu0
    %307 = vmatprep.mubr.f32.mxu0 0.0
    %308 = vmatmul.mubr.f32.gmra.mrb[0].mxu0 %v226
    %v309 = vpop.f32.mrb[0].mxu0
    %v310 = vadd.f32 0.0, %v309
    %v311 = vpop.f32.mrb[0].mxu0
    %312 = vdwg.mxu0
    %v313 = vmul.f32 %v295, %v170
    %v314 = vmul.f32 %v300, %v171
    %v315 = vmul.f32 %v305, %v172
    %v316 = vmul.f32 %v310, %v173
    %vm317 = vcmask 261120
    %v319 = vsel %vm317, %v118, 0
    %v322 = vsel %vm317, %v119, 0
    %324 = vmatprep.subr.mxu0 0.0
    %325 = vmatpush1.msra.mxu0 %v313
    %326 = vmatprep.subr.mxu0 0.0
    %327 = vmatpush1.msra.mxu0 %v314
    %328 = vmatprep.subr.mxu0 0.0
    %329 = vmatpush1.msra.mxu0 %v315
    %330 = vmatprep.subr.mxu0 0.0
    %331 = vmatpush1.msra.mxu0 %v316
    %332 = vmatprep.subr.mxu0 0.0
    %333 = vmatpush1.msra.mxu0 0.0
    %334 = vmatprep.subr.mxu0 0.0
    %335 = vmatpush1.msra.mxu0 0.0
    %336 = vmatprep.subr.mxu0 0.0
    %337 = vmatpush1.msra.mxu0 0.0
    %338 = vmatprep.subr.mxu0 0.0
    %339 = vmatpush1.msra.mxu0 0.0
    %340 = vmatprep.subr.mxu0 0.0
    %341 = vmatpush1.msra.mxu0 0.0
    %342 = vmatprep.subr.mxu0 0.0
    %343 = vmatpush1.msra.mxu0 0.0
    %344 = vmatprep.subr.mxu0 0.0
    %345 = vmatpush1.msra.mxu0 0.0
    %346 = vmatprep.subr.mxu0 0.0
    %347 = vmatpush1.msra.mxu0 0.0
    %348 = vmatprep.subr.mxu0 0.0
    %349 = vmatpush1.msra.mxu0 0.0
    %350 = vmatprep.subr.mxu0 0.0
    %351 = vmatpush1.msra.mxu0 0.0
    %352 = vmatprep.subr.mxu0 0.0
    %353 = vmatpush1.msra.mxu0 0.0
    %354 = vmatprep.subr.mxu0 0.0
    %355 = vmatpush1.msra.mxu0 0.0
    %356 = vmatprep.subr.mxu0 0.0
    %357 = vmatpush1.msra.mxu0 0.0
    %358 = vmatprep.subr.mxu0 0.0
    %359 = vmatpush1.msra.mxu0 0.0
    %360 = vmatprep.subr.mxu0 0.0
    %361 = vmatpush1.msra.mxu0 0.0
    %362 = vmatprep.subr.mxu0 0.0
    %363 = vmatpush1.msra.mxu0 0.0
    %364 = vmatprep.subr.mxu0 0.0
    %365 = vmatpush1.msra.mxu0 0.0
    %366 = vmatprep.subr.mxu0 0.0
    %367 = vmatpush1.msra.mxu0 0.0
    %368 = vmatprep.subr.mxu0 0.0
    %369 = vmatpush1.msra.mxu0 0.0
    %370 = vmatprep.subr.mxu0 0.0
    %371 = vmatpush1.msra.mxu0 0.0
    %372 = vmatprep.subr.mxu0 0.0
    %373 = vmatpush1.msra.mxu0 0.0
    %374 = vmatprep.subr.mxu0 0.0
    %375 = vmatpush1.msra.mxu0 0.0
    %376 = vmatprep.subr.mxu0 0.0
    %377 = vmatpush1.msra.mxu0 0.0
    %378 = vmatprep.subr.mxu0 0.0
    %379 = vmatpush1.msra.mxu0 0.0
    %380 = vmatprep.subr.mxu0 0.0
    %381 = vmatpush1.msra.mxu0 0.0
    %382 = vmatprep.subr.mxu0 0.0
    %383 = vmatpush1.msra.mxu0 0.0
    %384 = vmatprep.subr.mxu0 0.0
    %385 = vmatpush1.msra.mxu0 0.0
    %386 = vmatprep.subr.mxu0 0.0
    %387 = vmatpush1.msra.mxu0 0.0
    %388 = vmatprep.mubr.f32.mxu0 0.0
    %389 = vmatmul.mubr.f32.gmra.mrb[0].mxu0 %v319
    %v390 = vpop.f32.mrb[0].mxu0
    %v391 = vadd.f32 0.0, %v390
    %v392 = vpop.f32.mrb[0].mxu0
    %393 = vmatprep.mubr.f32.mxu0 0.0
    %394 = vmatmul.mubr.f32.gmra.mrb[0].mxu0 %v322
    %v395 = vpop.f32.mrb[0].mxu0
    %v396 = vadd.f32 0.0, %v395
    %v397 = vpop.f32.mrb[0].mxu0
    %398 = vdwg.mxu0
    %v399 = vlaneseq
    %v400 = vshrl.u32 %v399, 7
    %v401 = vsub.s32 0, %v400
    %v402 = vrot.slane %v20, %v401
    %v404 = vsel %vm317, %v170, 0
    %v407 = vsel %vm317, %v171, 0
    %v410 = vsel %vm317, %v172, 0
    %v413 = vsel %vm317, %v173, 0
    %v416 = vsel %vm317, %v391, 0
    %v419 = vsel %vm317, %v396, 0
    %421 = vmatprep.subr.mxu0 0.0
    %422 = vmatpush1.msra.mxu0 %v16
    %423 = vmatprep.subr.mxu0 0.0
    %424 = vmatpush1.msra.mxu0 %v17
    %425 = vmatprep.subr.mxu0 0.0
    %426 = vmatpush1.msra.mxu0 %v18
    %427 = vmatprep.subr.mxu0 0.0
    %428 = vmatpush1.msra.mxu0 %v19
    %429 = vmatprep.subr.mxu0 0.0
    %430 = vmatpush1.msra.mxu0 0.0
    %431 = vmatprep.subr.mxu0 0.0
    %432 = vmatpush1.msra.mxu0 0.0
    %433 = vmatprep.subr.mxu0 0.0
    %434 = vmatpush1.msra.mxu0 0.0
    %435 = vmatprep.subr.mxu0 0.0
    %436 = vmatpush1.msra.mxu0 0.0
    %437 = vmatprep.subr.mxu0 0.0
    %438 = vmatpush1.msra.mxu0 0.0
    %439 = vmatprep.subr.mxu0 0.0
    %440 = vmatpush1.msra.mxu0 0.0
    %441 = vmatprep.subr.mxu0 0.0
    %442 = vmatpush1.msra.mxu0 0.0
    %443 = vmatprep.subr.mxu0 0.0
    %444 = vmatpush1.msra.mxu0 0.0
    %445 = vmatprep.subr.mxu0 0.0
    %446 = vmatpush1.msra.mxu0 0.0
    %447 = vmatprep.subr.mxu0 0.0
    %448 = vmatpush1.msra.mxu0 0.0
    %449 = vmatprep.subr.mxu0 0.0
    %450 = vmatpush1.msra.mxu0 0.0
    %451 = vmatprep.subr.mxu0 0.0
    %452 = vmatpush1.msra.mxu0 0.0
    %453 = vmatprep.subr.mxu0 0.0
    %454 = vmatpush1.msra.mxu0 0.0
    %455 = vmatprep.subr.mxu0 0.0
    %456 = vmatpush1.msra.mxu0 0.0
    %457 = vmatprep.subr.mxu0 0.0
    %458 = vmatpush1.msra.mxu0 0.0
    %459 = vmatprep.subr.mxu0 0.0
    %460 = vmatpush1.msra.mxu0 0.0
    %461 = vmatprep.subr.mxu0 0.0
    %462 = vmatpush1.msra.mxu0 0.0
    %463 = vmatprep.subr.mxu0 0.0
    %464 = vmatpush1.msra.mxu0 0.0
    %465 = vmatprep.subr.mxu0 0.0
    %466 = vmatpush1.msra.mxu0 0.0
    %467 = vmatprep.subr.mxu0 0.0
    %468 = vmatpush1.msra.mxu0 0.0
    %469 = vmatprep.subr.mxu0 0.0
    %470 = vmatpush1.msra.mxu0 0.0
    %471 = vmatprep.subr.mxu0 0.0
    %472 = vmatpush1.msra.mxu0 0.0
    %473 = vmatprep.subr.mxu0 0.0
    %474 = vmatpush1.msra.mxu0 0.0
    %475 = vmatprep.subr.mxu0 0.0
    %476 = vmatpush1.msra.mxu0 0.0
    %477 = vmatprep.subr.mxu0 0.0
    %478 = vmatpush1.msra.mxu0 0.0
    %479 = vmatprep.subr.mxu0 0.0
    %480 = vmatpush1.msra.mxu0 0.0
    %481 = vmatprep.subr.mxu0 0.0
    %482 = vmatpush1.msra.mxu0 0.0
    %483 = vmatprep.subr.mxu0 0.0
    %484 = vmatpush1.msra.mxu0 0.0
    %485 = vmatprep.mubr.f32.mxu0 0.0
    %486 = vmatmul.mubr.f32.gmra.mrb[0].mxu0 %v404
    %v487 = vpop.f32.mrb[0].mxu0
    %v488 = vadd.f32 %v402, %v487
    %v489 = vpop.f32.mrb[0].mxu0
    %490 = vmatprep.mubr.f32.mxu0 0.0
    %491 = vmatmul.mubr.f32.gmra.mrb[0].mxu0 %v407
    %v492 = vpop.f32.mrb[0].mxu0
    %v493 = vadd.f32 %v402, %v492
    %v494 = vpop.f32.mrb[0].mxu0
    %495 = vmatprep.mubr.f32.mxu0 0.0
    %496 = vmatmul.mubr.f32.gmra.mrb[0].mxu0 %v410
    %v497 = vpop.f32.mrb[0].mxu0
    %v498 = vadd.f32 %v402, %v497
    %v499 = vpop.f32.mrb[0].mxu0
    %500 = vmatprep.mubr.f32.mxu0 0.0
    %501 = vmatmul.mubr.f32.gmra.mrb[0].mxu0 %v413
    %v502 = vpop.f32.mrb[0].mxu0
    %v503 = vadd.f32 %v402, %v502
    %v504 = vpop.f32.mrb[0].mxu0
    %505 = vmatprep.mubr.f32.mxu0 0.0
    %506 = vmatmul.mubr.f32.gmra.mrb[0].mxu0 %v416
    %v507 = vpop.f32.mrb[0].mxu0
    %v508 = vadd.f32 %v402, %v507
    %v509 = vpop.f32.mrb[0].mxu0
    %510 = vmatprep.mubr.f32.mxu0 0.0
    %511 = vmatmul.mubr.f32.gmra.mrb[0].mxu0 %v419
    %v512 = vpop.f32.mrb[0].mxu0
    %v513 = vadd.f32 %v402, %v512
    %v514 = vpop.f32.mrb[0].mxu0
    %515 = vdwg.mxu0
    %v516 = vmax.f32 %v488, 0.0
    %v517 = vmax.f32 %v493, 0.0
    %v518 = vmax.f32 %v498, 0.0
    %v519 = vmax.f32 %v503, 0.0
    %v520 = vmax.f32 %v508, 0.0
    %v521 = vmax.f32 %v513, 0.0
    %524 = vrot.lane.b32.xlu0 %v520, 96
    %v525 = vpop.permute.xlu0 %524
    %526 = vrot.lane.b32.xlu0 %v521, 96
    %v527 = vpop.permute.xlu0 %526
    %530 = vmatprep.subr.mxu0 0.0
    %531 = vmatpush1.msra.mxu0 %v525
    %532 = vmatprep.subr.mxu0 0.0
    %533 = vmatpush1.msra.mxu0 %v527
    %534 = vmatprep.subr.mxu0 0.0
    %535 = vmatpush1.msra.mxu0 0.0
    %536 = vmatprep.subr.mxu0 0.0
    %537 = vmatpush1.msra.mxu0 0.0
    %538 = vmatprep.subr.mxu0 0.0
    %539 = vmatpush1.msra.mxu0 0.0
    %540 = vmatprep.subr.mxu0 0.0
    %541 = vmatpush1.msra.mxu0 0.0
    %542 = vmatprep.subr.mxu0 0.0
    %543 = vmatpush1.msra.mxu0 0.0
    %544 = vmatprep.subr.mxu0 0.0
    %545 = vmatpush1.msra.mxu0 0.0
    %546 = vmatprep.subr.mxu0 0.0
    %547 = vmatpush1.msra.mxu0 0.0
    %548 = vmatprep.subr.mxu0 0.0
    %549 = vmatpush1.msra.mxu0 0.0
    %550 = vmatprep.subr.mxu0 0.0
    %551 = vmatpush1.msra.mxu0 0.0
    %552 = vmatprep.subr.mxu0 0.0
    %553 = vmatpush1.msra.mxu0 0.0
    %554 = vmatprep.subr.mxu0 0.0
    %555 = vmatpush1.msra.mxu0 0.0
    %556 = vmatprep.subr.mxu0 0.0
    %557 = vmatpush1.msra.mxu0 0.0
    %558 = vmatprep.subr.mxu0 0.0
    %559 = vmatpush1.msra.mxu0 0.0
    %560 = vmatprep.subr.mxu0 0.0
    %561 = vmatpush1.msra.mxu0 0.0
    %562 = vmatprep.subr.mxu0 0.0
    %563 = vmatpush1.msra.mxu0 0.0
    %564 = vmatprep.subr.mxu0 0.0
    %565 = vmatpush1.msra.mxu0 0.0
    %566 = vmatprep.subr.mxu0 0.0
    %567 = vmatpush1.msra.mxu0 0.0
    %568 = vmatprep.subr.mxu0 0.0
    %569 = vmatpush1.msra.mxu0 0.0
    %570 = vmatprep.subr.mxu0 0.0
    %571 = vmatpush1.msra.mxu0 0.0
    %572 = vmatprep.subr.mxu0 0.0
    %573 = vmatpush1.msra.mxu0 0.0
    %574 = vmatprep.subr.mxu0 0.0
    %575 = vmatpush1.msra.mxu0 0.0
    %576 = vmatprep.subr.mxu0 0.0
    %577 = vmatpush1.msra.mxu0 0.0
    %578 = vmatprep.subr.mxu0 0.0
    %579 = vmatpush1.msra.mxu0 0.0
    %580 = vmatprep.subr.mxu0 0.0
    %581 = vmatpush1.msra.mxu0 0.0
    %582 = vmatprep.subr.mxu0 0.0
    %583 = vmatpush1.msra.mxu0 0.0
    %584 = vmatprep.subr.mxu0 0.0
    %585 = vmatpush1.msra.mxu0 0.0
    %586 = vmatprep.subr.mxu0 0.0
    %587 = vmatpush1.msra.mxu0 0.0
    %588 = vmatprep.subr.mxu0 0.0
    %589 = vmatpush1.msra.mxu0 0.0
    %590 = vmatprep.subr.mxu0 0.0
    %591 = vmatpush1.msra.mxu0 0.0
    %592 = vmatprep.subr.mxu0 0.0
    %593 = vmatpush1.msra.mxu0 0.0
    %594 = vmatprep.mubr.f32.mxu0 0.0
    %595 = vmatmul.mubr.f32.gmra.mrb[0].mxu0 %v217
    %v596 = vpop.f32.mrb[0].mxu0
    %v597 = vadd.f32 0.0, %v596
    %v598 = vpop.f32.mrb[0].mxu0
    %599 = vmatprep.mubr.f32.mxu0 0.0
    %600 = vmatmul.mubr.f32.gmra.mrb[0].mxu0 %v220
    %v601 = vpop.f32.mrb[0].mxu0
    %v602 = vadd.f32 0.0, %v601
    %v603 = vpop.f32.mrb[0].mxu0
    %604 = vmatprep.mubr.f32.mxu0 0.0
    %605 = vmatmul.mubr.f32.gmra.mrb[0].mxu0 %v223
    %v606 = vpop.f32.mrb[0].mxu0
    %v607 = vadd.f32 0.0, %v606
    %v608 = vpop.f32.mrb[0].mxu0
    %609 = vmatprep.mubr.f32.mxu0 0.0
    %610 = vmatmul.mubr.f32.gmra.mrb[0].mxu0 %v226
    %v611 = vpop.f32.mrb[0].mxu0
    %v612 = vadd.f32 0.0, %v611
    %v613 = vpop.f32.mrb[0].mxu0
    %614 = vdwg.mxu0
    %v615 = vmul.f32 %v597, %v516
    %v616 = vmul.f32 %v602, %v517
    %v617 = vmul.f32 %v607, %v518
    %v618 = vmul.f32 %v612, %v519
    %619 = vmatprep.subr.mxu0 0.0
    %620 = vmatpush1.msra.mxu0 %v615
    %621 = vmatprep.subr.mxu0 0.0
    %622 = vmatpush1.msra.mxu0 %v616
    %623 = vmatprep.subr.mxu0 0.0
    %624 = vmatpush1.msra.mxu0 %v617
    %625 = vmatprep.subr.mxu0 0.0
    %626 = vmatpush1.msra.mxu0 %v618
    %627 = vmatprep.subr.mxu0 0.0
    %628 = vmatpush1.msra.mxu0 0.0
    %629 = vmatprep.subr.mxu0 0.0
    %630 = vmatpush1.msra.mxu0 0.0
    %631 = vmatprep.subr.mxu0 0.0
    %632 = vmatpush1.msra.mxu0 0.0
    %633 = vmatprep.subr.mxu0 0.0
    %634 = vmatpush1.msra.mxu0 0.0
    %635 = vmatprep.subr.mxu0 0.0
    %636 = vmatpush1.msra.mxu0 0.0
    %637 = vmatprep.subr.mxu0 0.0
    %638 = vmatpush1.msra.mxu0 0.0
    %639 = vmatprep.subr.mxu0 0.0
    %640 = vmatpush1.msra.mxu0 0.0
    %641 = vmatprep.subr.mxu0 0.0
    %642 = vmatpush1.msra.mxu0 0.0
    %643 = vmatprep.subr.mxu0 0.0
    %644 = vmatpush1.msra.mxu0 0.0
    %645 = vmatprep.subr.mxu0 0.0
    %646 = vmatpush1.msra.mxu0 0.0
    %647 = vmatprep.subr.mxu0 0.0
    %648 = vmatpush1.msra.mxu0 0.0
    %649 = vmatprep.subr.mxu0 0.0
    %650 = vmatpush1.msra.mxu0 0.0
    %651 = vmatprep.subr.mxu0 0.0
    %652 = vmatpush1.msra.mxu0 0.0
    %653 = vmatprep.subr.mxu0 0.0
    %654 = vmatpush1.msra.mxu0 0.0
    %655 = vmatprep.subr.mxu0 0.0
    %656 = vmatpush1.msra.mxu0 0.0
    %657 = vmatprep.subr.mxu0 0.0
    %658 = vmatpush1.msra.mxu0 0.0
    %659 = vmatprep.subr.mxu0 0.0
    %660 = vmatpush1.msra.mxu0 0.0
    %661 = vmatprep.subr.mxu0 0.0
    %662 = vmatpush1.msra.mxu0 0.0
    %663 = vmatprep.subr.mxu0 0.0
    %664 = vmatpush1.msra.mxu0 0.0
    %665 = vmatprep.subr.mxu0 0.0
    %666 = vmatpush1.msra.mxu0 0.0
    %667 = vmatprep.subr.mxu0 0.0
    %668 = vmatpush1.msra.mxu0 0.0
    %669 = vmatprep.subr.mxu0 0.0
    %670 = vmatpush1.msra.mxu0 0.0
    %671 = vmatprep.subr.mxu0 0.0
    %672 = vmatpush1.msra.mxu0 0.0
    %673 = vmatprep.subr.mxu0 0.0
    %674 = vmatpush1.msra.mxu0 0.0
    %675 = vmatprep.subr.mxu0 0.0
    %676 = vmatpush1.msra.mxu0 0.0
    %677 = vmatprep.subr.mxu0 0.0
    %678 = vmatpush1.msra.mxu0 0.0
    %679 = vmatprep.subr.mxu0 0.0
    %680 = vmatpush1.msra.mxu0 0.0
    %681 = vmatprep.subr.mxu0 0.0
    %682 = vmatpush1.msra.mxu0 0.0
    %683 = vmatprep.mubr.f32.mxu0 0.0
    %684 = vmatmul.mubr.f32.gmra.mrb[0].mxu0 %v319
    %v685 = vpop.f32.mrb[0].mxu0
    %v686 = vadd.f32 0.0, %v685
    %v687 = vpop.f32.mrb[0].mxu0
    %688 = vmatprep.mubr.f32.mxu0 0.0
    %689 = vmatmul.mubr.f32.gmra.mrb[0].mxu0 %v322
    %v690 = vpop.f32.mrb[0].mxu0
    %v691 = vadd.f32 0.0, %v690
    %v692 = vpop.f32.mrb[0].mxu0
    %693 = vdwg.mxu0
    %v694 = vsel %vm317, %v686, -inf
    %v695 = vsel %vm317, %v691, -inf
    %v696 = vmax.f32 %v694, %v695
    %v697 = vrot.slane %v696, 4
    %v698 = vmax.f32 %v696, %v697
    %v699 = vrot.slane %v698, 2
    %v700 = vmax.f32 %v698, %v699
    %v701 = vrot.slane %v700, 1
    %v702 = vmax.f32 %v700, %v701
    %vm708 = vcmask 1043456
    %v709 = vrot.slane %v20, 4
    %v710 = vrot.slane %v21, 4
    %v711 = vsel %vm708, %v709, %v710
    %v712 = vrot.slane %v22, 4
    %v713 = vsel %vm708, %v710, %v712
    %v714 = vrot.slane %v23, 4
    %v715 = vsel %vm708, %v712, %v714
    %v716 = vrot.slane %v24, 4
    %v717 = vsel %vm708, %v714, %v716
    %v724 = vsel %vm317, %v702, 0
    %726 = vmatprep.subr.mxu0 0.0
    %727 = vmatpush1.msra.mxu0 %v711
    %728 = vmatprep.subr.mxu0 0.0
    %729 = vmatpush1.msra.mxu0 %v713
    %730 = vmatprep.subr.mxu0 0.0
    %731 = vmatpush1.msra.mxu0 %v715
    %732 = vmatprep.subr.mxu0 0.0
    %733 = vmatpush1.msra.mxu0 %v717
    %734 = vmatprep.subr.mxu0 0.0
    %735 = vmatpush1.msra.mxu0 0.0
    %736 = vmatprep.subr.mxu0 0.0
    %737 = vmatpush1.msra.mxu0 0.0
    %738 = vmatprep.subr.mxu0 0.0
    %739 = vmatpush1.msra.mxu0 0.0
    %740 = vmatprep.subr.mxu0 0.0
    %741 = vmatpush1.msra.mxu0 0.0
    %742 = vmatprep.subr.mxu0 0.0
    %743 = vmatpush1.msra.mxu0 0.0
    %744 = vmatprep.subr.mxu0 0.0
    %745 = vmatpush1.msra.mxu0 0.0
    %746 = vmatprep.subr.mxu0 0.0
    %747 = vmatpush1.msra.mxu0 0.0
    %748 = vmatprep.subr.mxu0 0.0
    %749 = vmatpush1.msra.mxu0 0.0
    %750 = vmatprep.subr.mxu0 0.0
    %751 = vmatpush1.msra.mxu0 0.0
    %752 = vmatprep.subr.mxu0 0.0
    %753 = vmatpush1.msra.mxu0 0.0
    %754 = vmatprep.subr.mxu0 0.0
    %755 = vmatpush1.msra.mxu0 0.0
    %756 = vmatprep.subr.mxu0 0.0
    %757 = vmatpush1.msra.mxu0 0.0
    %758 = vmatprep.subr.mxu0 0.0
    %759 = vmatpush1.msra.mxu0 0.0
    %760 = vmatprep.subr.mxu0 0.0
    %761 = vmatpush1.msra.mxu0 0.0
    %762 = vmatprep.subr.mxu0 0.0
    %763 = vmatpush1.msra.mxu0 0.0
    %764 = vmatprep.subr.mxu0 0.0
    %765 = vmatpush1.msra.mxu0 0.0
    %766 = vmatprep.subr.mxu0 0.0
    %767 = vmatpush1.msra.mxu0 0.0
    %768 = vmatprep.subr.mxu0 0.0
    %769 = vmatpush1.msra.mxu0 0.0
    %770 = vmatprep.subr.mxu0 0.0
    %771 = vmatpush1.msra.mxu0 0.0
    %772 = vmatprep.subr.mxu0 0.0
    %773 = vmatpush1.msra.mxu0 0.0
    %774 = vmatprep.subr.mxu0 0.0
    %775 = vmatpush1.msra.mxu0 0.0
    %776 = vmatprep.subr.mxu0 0.0
    %777 = vmatpush1.msra.mxu0 0.0
    %778 = vmatprep.subr.mxu0 0.0
    %779 = vmatpush1.msra.mxu0 0.0
    %780 = vmatprep.subr.mxu0 0.0
    %781 = vmatpush1.msra.mxu0 0.0
    %782 = vmatprep.subr.mxu0 0.0
    %783 = vmatpush1.msra.mxu0 0.0
    %784 = vmatprep.subr.mxu0 0.0
    %785 = vmatpush1.msra.mxu0 0.0
    %786 = vmatprep.subr.mxu0 0.0
    %787 = vmatpush1.msra.mxu0 0.0
    %788 = vmatprep.subr.mxu0 0.0
    %789 = vmatpush1.msra.mxu0 0.0
    %790 = vmatprep.mubr.f32.mxu0 0.0
    %791 = vmatmul.mubr.f32.gmra.mrb[0].mxu0 %v724
    %v792 = vpop.f32.mrb[0].mxu0
    %v793 = vadd.f32 %v716, %v792
    %v794 = vpop.f32.mrb[0].mxu0
    %795 = vdwg.mxu0
    %vm796 = vcmask 8192
    %797 = vst.msk [vmem:[#allocation2] sm:$0x1] %vm796, %v793
    // Predicated region
    $region10: #{classifier_forward.1} parent=1 // pred_check
      _
    $region11: #{classifier_forward.1} parent=1 // pred_check_branch
      %799 = sbr.rel (0) target = $region13
    $region12: #{classifier_forward.1} parent=1 // pred_region
      %s801 = ssub.s32 16, 16
      %802 = vsyncadd [#allocation3], %s801
      %s804 = sshll.u32 [#allocation2], 4
      %s805 = int_to_ptr.vmem [resolvable:$true] %s804
      %807 = dma.vmem_to_hbm [thread:$0]  %s805, 16, %s2, [#allocation3]
    $region13: #{classifier_forward.1} parent=1 // pred_fallthru
      _
    // Predicated region
    $region14: #{classifier_forward.1} parent=1 // pred_check
      _
    $region15: #{classifier_forward.1} parent=1 // pred_check_branch
      %809 = sbr.rel (0) target = $region17
    $region16: #{classifier_forward.1} parent=1 // pred_region
      %810 = dma.done [#allocation3], 16
    $region17: #{classifier_forward.1} parent=1 // pred_fallthru
      _
    %811 = vsyncpa [#allocation3], 1

</llo_original>
